<compile_context>
chip_gen: v7x
topology: tpu7x:2x2x1
jax: 0.10.0
libtpu: 0.0.40
codegen_flags: <defaults>
</compile_context>

<pallas_src>
import functools

import jax
import jax.numpy as jnp
from jax.experimental import pallas as pl
from jax.experimental.pallas import tpu as pltpu


# ---------------------------------------------------------------------------
# Kernel: one batch tile per grid step, packed weights resident across steps.
# ---------------------------------------------------------------------------
def dqn_kernel(x_ref, p1_ref, p2_ref, o_ref):
    # fc1 + bias (bias folded into last row of P1 via the ones column of x).
    h = jnp.dot(x_ref[...], p1_ref[...], preferred_element_type=jnp.float32)
    h = jnp.maximum(h, 0.0)  # ReLU; also turns the bias unit into a constant 1.
    # fc2 + bias (bias folded into the "constant 1" hidden row of P2).
    o_ref[...] = jnp.dot(
        h, p2_ref[...], preferred_element_type=jnp.float32
    ).astype(o_ref.dtype)


# ---------------------------------------------------------------------------
# One-time parameter packing (bias folding + lane padding).
# ---------------------------------------------------------------------------
def pack_params(w1, b1, w2, b2, hidden_pad=128, action_pad=128):
    """Pack (W1, b1, W2, b2) into two lane-dense matrices.

    W1: (state_dim, hidden), b1: (hidden,), W2: (hidden, action_dim), b2: (action_dim,)
    Returns P1: (state_dim + 1, hidden_pad), P2: (hidden_pad, action_pad).
    """
    state_dim, hidden = w1.shape
    action_dim = w2.shape[1]
    assert hidden_pad >= hidden + 1, "need one spare hidden slot for the bias unit"
    assert action_pad >= action_dim

    p1 = jnp.zeros((state_dim + 1, hidden_pad), jnp.float32)
    p1 = p1.at[:state_dim, :hidden].set(w1.astype(jnp.float32))
    p1 = p1.at[state_dim, :hidden].set(b1.astype(jnp.float32))
    p1 = p1.at[state_dim, hidden].set(1.0)  # bias unit: relu(0*x + 1) == 1 always

    p2 = jnp.zeros((hidden_pad, action_pad), jnp.float32)
    p2 = p2.at[:hidden, :action_dim].set(w2.astype(jnp.float32))
    p2 = p2.at[hidden, :action_dim].set(b2.astype(jnp.float32))
    return p1, p2


# ---------------------------------------------------------------------------
# Wrapper: augment x with a ones column, tile the batch, call the kernel,
# slice the lane-dense output slab back down to (batch, action_dim).
# ---------------------------------------------------------------------------
@functools.partial(jax.jit, static_argnames=("action_dim", "max_tb"))
def dqn_forward(x, p1, p2, *, action_dim, max_tb=128):
    batch, _ = x.shape
    sd1, hidden_pad = p1.shape          # state_dim + 1, padded hidden
    action_pad = p2.shape[1]

    # Ones column folds the fc1 bias into the matmul.
    x_aug = jnp.concatenate(
        [x.astype(jnp.float32), jnp.ones((batch, 1), jnp.float32)], axis=1)

    # Pick a batch tile: multiple of 8 sublanes, capped at max_tb, sized so a
    # tiny inference batch doesn't pay for a full 128-row tile of padding.
    tb = min(max_tb, ((batch + 7) // 8) * 8)
    n_tiles = pl.cdiv(batch, tb)
    batch_pad = n_tiles * tb
    if batch_pad != batch:
        x_aug = jnp.pad(x_aug, ((0, batch_pad - batch), (0, 0)))

    out_pad = pl.pallas_call(
        dqn_kernel,
        out_shape=jax.ShapeDtypeStruct((batch_pad, action_pad), jnp.float32),
        grid_spec=pltpu.PrefetchScalarGridSpec(
            num_scalar_prefetch=0,
            grid=(n_tiles,),
            in_specs=[
                # Activations stream: one (tb, state_dim+1) tile per step.
                pl.BlockSpec((tb, sd1), lambda i: (i, 0)),
                # Packed weights stay VMEM-resident across all steps.
                pl.BlockSpec((sd1, hidden_pad), lambda i: (0, 0)),
                pl.BlockSpec((hidden_pad, action_pad), lambda i: (0, 0)),
            ],
            out_specs=pl.BlockSpec((tb, action_pad), lambda i: (i, 0)),
        ),
        compiler_params=pltpu.CompilerParams(
            # Batch tiles are independent -> shard across v7x's 2 TensorCores.
            dimension_semantics=("parallel",),
        ),
    )(x_aug, p1, p2)

    return out_pad[:batch, :action_dim]


# ---------------------------------------------------------------------------
# Deterministic init mimicking torch.nn.Linear defaults, and a pure-JAX ref.
# ---------------------------------------------------------------------------
def init_params(key, state_dim, action_dim, hidden=12):
    k1, k2, k3, k4 = jax.random.split(key, 4)
    bound1 = 1.0 / jnp.sqrt(jnp.float32(state_dim))
    bound2 = 1.0 / jnp.sqrt(jnp.float32(hidden))
    w1 = jax.random.uniform(k1, (state_dim, hidden), jnp.float32, -bound1, bound1)
    b1 = jax.random.uniform(k2, (hidden,), jnp.float32, -bound1, bound1)
    w2 = jax.random.uniform(k3, (hidden, action_dim), jnp.float32, -bound2, bound2)
    b2 = jax.random.uniform(k4, (action_dim,), jnp.float32, -bound2, bound2)
    return w1, b1, w2, b2


def reference_forward(x, w1, b1, w2, b2):
    h = jnp.maximum(x @ w1 + b1, 0.0)
    return h @ w2 + b2


if __name__ == "__main__":
    # CartPole dims (state=4, actions=2, hidden=12); replay-minibatch-sized
    # batch so a single pallas_call amortizes launch + DMA overhead.
    batch, state_dim, action_dim, hidden = 256, 4, 2, 12

    key = jax.random.PRNGKey(0)
    kx, kp = jax.random.split(key)
    x = jax.random.normal(kx, (batch, state_dim), jnp.float32)
    w1, b1, w2, b2 = init_params(kp, state_dim, action_dim, hidden)

    p1, p2 = pack_params(w1, b1, w2, b2)          # one-time packing / padding

    out = dqn_forward(x, p1, p2, action_dim=action_dim, max_tb=128)
    out = jax.block_until_ready(out)

    ref = reference_forward(x, w1, b1, w2, b2)
    assert out.shape == (batch, action_dim)
    assert jnp.allclose(out, ref, atol=1e-5, rtol=1e-5), "mismatch vs reference"

    # Also exercise a tiny (action-selection sized) batch through the same path.
    x1 = jax.random.normal(jax.random.PRNGKey(1), (1, state_dim), jnp.float32)
    out1 = jax.block_until_ready(dqn_forward(x1, p1, p2, action_dim=action_dim))
    ref1 = reference_forward(x1, w1, b1, w2, b2)
    assert out1.shape == (1, action_dim)
    assert jnp.allclose(out1, ref1, atol=1e-5, rtol=1e-5), "mismatch vs reference (b=1)"

    print("KERNEL_OK")
</pallas_src>

<mosaic_0001>
module attributes {stable_mosaic.version = 11 : i64} {
  func.func @dqn_kernel(%arg0: i32, %arg1: memref<128x5xf32, #tpu.memory_space<vmem>>, %arg2: memref<5x128xf32, #tpu.memory_space<vmem>>, %arg3: memref<128x128xf32, #tpu.memory_space<vmem>>, %arg4: memref<128x128xf32, #tpu.memory_space<vmem>>) attributes {dimension_semantics = [#tpu.dimension_semantics<parallel>], iteration_bounds = array<i64: 2>, scalar_prefetch = 0 : i64, scratch_operands = 0 : i64, tpu.core_type = #tpu.core_type<tc>, window_params = [{transform_indices = @transform_0, window_bounds = array<i64: 128, 5>}, {pipeline_mode = #tpu.pipeline_mode<synchronous>, transform_indices = @transform_1, window_bounds = array<i64: 5, 128>}, {pipeline_mode = #tpu.pipeline_mode<synchronous>, transform_indices = @transform_2, window_bounds = array<i64: 128, 128>}, {transform_indices = @transform_3, window_bounds = array<i64: 128, 128>}]} {
    %c0 = arith.constant 0 : index
    %c0_0 = arith.constant 0 : index
    %0 = vector.load %arg1[%c0, %c0_0] : memref<128x5xf32, #tpu.memory_space<vmem>>, vector<128x5xf32>
    %c0_1 = arith.constant 0 : index
    %c0_2 = arith.constant 0 : index
    %1 = vector.load %arg2[%c0_1, %c0_2] : memref<5x128xf32, #tpu.memory_space<vmem>>, vector<5x128xf32>
    %cst = arith.constant dense<0.000000e+00> : vector<128x128xf32>
    %2 = tpu.matmul %0, %1, %cst {dimension_numbers = #tpu.dot_dimension_numbers<[1], [0], [0], [1], [0, 0, 1, 1], [], []>} : vector<128x5xf32>, vector<5x128xf32>, vector<128x128xf32> -> vector<128x128xf32>
    %cst_3 = arith.constant 0.000000e+00 : f32
    %3 = vector.broadcast %cst_3 : f32 to vector<128x128xf32>
    %4 = arith.maximumf %2, %3 : vector<128x128xf32>
    %c0_4 = arith.constant 0 : index
    %c0_5 = arith.constant 0 : index
    %5 = vector.load %arg3[%c0_4, %c0_5] : memref<128x128xf32, #tpu.memory_space<vmem>>, vector<128x128xf32>
    %cst_6 = arith.constant dense<0.000000e+00> : vector<128x128xf32>
    %6 = tpu.matmul %4, %5, %cst_6 {dimension_numbers = #tpu.dot_dimension_numbers<[1], [0], [0], [1], [0, 0, 1, 1], [], []>} : vector<128x128xf32>, vector<128x128xf32>, vector<128x128xf32> -> vector<128x128xf32>
    %c0_7 = arith.constant 0 : index
    %c0_8 = arith.constant 0 : index
    %7 = vector.load %arg4[%c0_7, %c0_8] : memref<128x128xf32, #tpu.memory_space<vmem>>, vector<128x128xf32>
    tpu.vector_store %arg4[%c0_7, %c0_8], %6 {strides = array<i32>} : memref<128x128xf32, #tpu.memory_space<vmem>>, vector<128x128xf32>,
    return
  }
  func.func @transform_0(%arg0: i32) -> (i32, i32) {
    %c0_i32 = arith.constant 0 : i32
    %c0_i32_0 = arith.constant 0 : i32
    return %arg0, %c0_i32 : i32, i32
  }
  func.func @transform_1(%arg0: i32) -> (i32, i32) {
    %c0_i32 = arith.constant 0 : i32
    %c0_i32_0 = arith.constant 0 : i32
    %c0_i32_1 = arith.constant 0 : i32
    return %c0_i32, %c0_i32_0 : i32, i32
  }
  func.func @transform_2(%arg0: i32) -> (i32, i32) {
    %c0_i32 = arith.constant 0 : i32
    %c0_i32_0 = arith.constant 0 : i32
    %c0_i32_1 = arith.constant 0 : i32
    return %c0_i32, %c0_i32_0 : i32, i32
  }
  func.func @transform_3(%arg0: i32) -> (i32, i32) {
    %c0_i32 = arith.constant 0 : i32
    %c0_i32_0 = arith.constant 0 : i32
    return %arg0, %c0_i32 : i32, i32
  }
}

</mosaic_0001>

<llo_original>
// kernel: dqn_forward.1
$region0: #{dqn_forward.1}
  #allocation0 [shape = 'u32[]', space=smem, size = 0x4, offset = 0x4, fixed_abs, tag = 'smem constant byte address 0x4 - core index']
  #allocation1 [shape = 'u32[144,128]{1,0:T(1,128)}', space=vmem, size = 0x12000, scoped, tag = 'internal scratch']
  %s0 = inlined_call_operand.vmem [shape: f32[256,5], index: 0, kind: input, shape index: {}]
  %s1 = inlined_call_operand.vmem [shape: f32[5,128], index: 1, kind: input, shape index: {}]
  %s2 = inlined_call_operand.vmem [shape: f32[128,128], index: 2, kind: input, shape index: {}]
  %s3 = inlined_call_operand.vmem [shape: f32[256,128], index: 3, kind: output, shape index: {}]
  %s4 = sld [smem:[#allocation0]]
  $region45: #{dqn_forward.1} parent=0
    _
  %s6 = ssub.s32 1, %s4
  %s7 = scalar_select 0, %s6, %s4
  loop: start=0, step=1, limit=4
  $region2: #{dqn_forward.1} parent=0 // loop_pre_header
    _
  $region3: #{dqn_forward.1} parent=0 // loop_header
    %s9 = sphi 0, %s13
    %p10 = scmp.ge.s32.totalorder %s9, 4
    %s19 = sphi 0, %s21
    %s22 = sphi 0, %s19
    %s23 = sphi 0, %s22
    %s39 = sphi 0, %s23
    %s43 = sphi 0, %s43
    %s45 = sphi 0, %s43
    %s46 = sphi 0, %s45
    %s60 = sphi 0, %s46
    %s64 = sphi 0, %s64
    %s66 = sphi 0, %s64
    %s67 = sphi 0, %s66
    %s81 = sphi 0, %s67
    %s87 = sphi 0, %s89
    %s90 = sphi 0, %s87
    %s91 = sphi 0, %s90
    %s107 = sphi 0, %s91
  $region4: #{dqn_forward.1} parent=0 // loop_header_branch
    %12 = sbr.rel (%p10) target = $region8
  $region5: #{dqn_forward.1} parent=0 // loop_body
    %s14 = ssub.s32 %s9, 1
    %s15 = ssub.s32 %s9, 2
    %s16 = sadd.s32 %s9, 1
    %s17 = ssub.s32 %s9, %s16
    %p18 = scmp.eq.s32.totalorder %s17, 0
    %s20 = sadd.s32 %s19, 1
    %s21 = scalar_select %p18, %s19, %s20
    %p24 = pneg %p18
    %p25 = scmp.eq.s32.totalorder %s9, 1
    %p26 = por %p24, %p25
    %p27 = scmp.ne.s32.totalorder %s19, %s22
    %p28 = scmp.eq.s32.totalorder %s9, 0
    %p29 = por %p27, %p28
    %p30 = scmp.ne.s32.totalorder %s19, %s22
    %p31 = scmp.eq.s32.totalorder %s14, 1
    %p32 = por %p30, %p31
    %p33 = scmp.ne.s32.totalorder %s22, %s23
    %p34 = scmp.eq.s32.totalorder %s14, 0
    %p35 = por %p33, %p34
    %p36 = scmp.ne.s32.totalorder %s22, %s23
    %p37 = scmp.eq.s32.totalorder %s15, 1
    %p38 = por %p36, %p37
    %p40 = scmp.ne.s32.totalorder %s23, %s39
    %p41 = scmp.eq.s32.totalorder %s15, 0
    %p42 = por %p40, %p41
    %s44 = sadd.s32 %s43, 1
    %p47 = scmp.eq.s32.totalorder %s9, 1
    %p48 = scmp.ne.s32.totalorder %s43, %s45
    %p49 = scmp.eq.s32.totalorder %s9, 0
    %p50 = por %p48, %p49
    %p51 = scmp.ne.s32.totalorder %s43, %s45
    %p52 = scmp.eq.s32.totalorder %s14, 1
    %p53 = por %p51, %p52
    %p54 = scmp.ne.s32.totalorder %s45, %s46
    %p55 = scmp.eq.s32.totalorder %s14, 0
    %p56 = por %p54, %p55
    %p57 = scmp.ne.s32.totalorder %s45, %s46
    %p58 = scmp.eq.s32.totalorder %s15, 1
    %p59 = por %p57, %p58
    %p61 = scmp.ne.s32.totalorder %s46, %s60
    %p62 = scmp.eq.s32.totalorder %s15, 0
    %p63 = por %p61, %p62
    %s65 = sadd.s32 %s64, 1
    %p68 = scmp.eq.s32.totalorder %s9, 1
    %p69 = scmp.ne.s32.totalorder %s64, %s66
    %p70 = scmp.eq.s32.totalorder %s9, 0
    %p71 = por %p69, %p70
    %p72 = scmp.ne.s32.totalorder %s64, %s66
    %p73 = scmp.eq.s32.totalorder %s14, 1
    %p74 = por %p72, %p73
    %p75 = scmp.ne.s32.totalorder %s66, %s67
    %p76 = scmp.eq.s32.totalorder %s14, 0
    %p77 = por %p75, %p76
    %p78 = scmp.ne.s32.totalorder %s66, %s67
    %p79 = scmp.eq.s32.totalorder %s15, 1
    %p80 = por %p78, %p79
    %p82 = scmp.ne.s32.totalorder %s67, %s81
    %p83 = scmp.eq.s32.totalorder %s15, 0
    %p84 = por %p82, %p83
    %s85 = ssub.s32 %s9, %s16
    %p86 = scmp.eq.s32.totalorder %s85, 0
    %s88 = sadd.s32 %s87, 1
    %s89 = scalar_select %p86, %s87, %s88
    %p92 = pneg %p86
    %p93 = scmp.eq.s32.totalorder %s9, 1
    %p94 = por %p92, %p93
    %p95 = scmp.ne.s32.totalorder %s87, %s90
    %p96 = scmp.eq.s32.totalorder %s9, 0
    %p97 = por %p95, %p96
    %p98 = scmp.ne.s32.totalorder %s87, %s90
    %p99 = scmp.eq.s32.totalorder %s14, 1
    %p100 = por %p98, %p99
    %p101 = scmp.ne.s32.totalorder %s90, %s91
    %p102 = scmp.eq.s32.totalorder %s14, 0
    %p103 = por %p101, %p102
    %p104 = scmp.ne.s32.totalorder %s90, %s91
    %p105 = scmp.eq.s32.totalorder %s15, 1
    %p106 = por %p104, %p105
    %p108 = scmp.ne.s32.totalorder %s91, %s107
    %p109 = scmp.eq.s32.totalorder %s15, 0
    %p110 = por %p108, %p109
    %p111 = scmp.le.s32.totalorder 1, %s9
    %p112 = scmp.lt.s32.totalorder %s9, 3
    %p113 = pnand %p111, %p112
    %p114 = pneg %p113
    // Predicated region
    $region9: #{dqn_forward.1} parent=5 // pred_check
      _
    $region10: #{dqn_forward.1} parent=5 // pred_check_branch
      %116 = sbr.rel (%p113) target = $region12
    $region11: #{dqn_forward.1} parent=5 // pred_region
      %s117 = ssub.s32 %s9, 1
      // Predicated region
      $region13: #{dqn_forward.1} parent=11 // pred_check
        %p118 = pneg %p56
      $region14: #{dqn_forward.1} parent=11 // pred_check_branch
        %120 = sbr.rel (%p118) target = $region16
      $region15: #{dqn_forward.1} parent=11 // pred_region
        _
      $region16: #{dqn_forward.1} parent=11 // pred_fallthru
        _
      // Predicated region
      $region17: #{dqn_forward.1} parent=11 // pred_check
        %p121 = pneg %p77
      $region18: #{dqn_forward.1} parent=11 // pred_check_branch
        %123 = sbr.rel (%p121) target = $region20
      $region19: #{dqn_forward.1} parent=11 // pred_region
        _
      $region20: #{dqn_forward.1} parent=11 // pred_fallthru
        _
    $region12: #{dqn_forward.1} parent=5 // pred_fallthru
      _
    %p124 = scmp.lt.s32.totalorder %s9, 2
    // Predicated region
    $region21: #{dqn_forward.1} parent=5 // pred_check
      %p125 = pneg %p124
    $region22: #{dqn_forward.1} parent=5 // pred_check_branch
      %127 = sbr.rel (%p125) target = $region24
    $region23: #{dqn_forward.1} parent=5 // pred_region
      // Predicated region
      $region25: #{dqn_forward.1} parent=23 // pred_check
        %p128 = pneg %p29
      $region26: #{dqn_forward.1} parent=23 // pred_check_branch
        %130 = sbr.rel (%p128) target = $region28
      $region27: #{dqn_forward.1} parent=23 // pred_region
        %s131 = smul.u32 16, %s9
        %p132 = scmp.lt.s32.totalorder %s131, 31
        %s133 = scalar_select %p132, %s131, 31
        %s134 = smul.addr %s133, 8
        %s135 = scalar_lea.vmem %s0, %s134
        %s136 = smul.u32 16, %s9
      $region28: #{dqn_forward.1} parent=23 // pred_fallthru
        _
    $region24: #{dqn_forward.1} parent=5 // pred_fallthru
      _
    %p137 = scmp.le.s32.totalorder 1, %s9
    %p138 = scmp.lt.s32.totalorder %s9, 3
    %p139 = pnand %p137, %p138
    %p140 = pneg %p139
    // Predicated region
    $region29: #{dqn_forward.1} parent=5 // pred_check
      _
    $region30: #{dqn_forward.1} parent=5 // pred_check_branch
      %142 = sbr.rel (%p139) target = $region32
    $region31: #{dqn_forward.1} parent=5 // pred_region
      %s143 = ssub.s32 %s9, 1
      %s144 = smul.u32 16, %s14
      %p145 = scmp.lt.s32.totalorder %s144, 31
      %s146 = scalar_select %p145, %s144, 31
      %s147 = smul.addr %s146, 8
      %s148 = scalar_lea.vmem %s0, %s147
      %p149 = pneg %p35
      %p150 = pneg %p32
      %p151 = pneg %p56
      %p152 = pneg %p53
      %p153 = pneg %p77
      %p154 = pneg %p74
      %p155 = pneg %p103
      %p156 = pneg %p100
      %s157 = smul.u32 16, %s14
      %p158 = scmp.lt.s32.totalorder %s157, 31
      %s159 = scalar_select %p158, %s157, 31
      %s160 = smul.addr %s159, 8
      %s161 = scalar_lea.vmem %s3, %s160
      %s162 = smul.u32 16, %s14
      %p163 = scmp.lt.s32.totalorder %s162, 31
      %s164 = scalar_select %p163, %s162, 31
      %s165 = smul.addr %s164, 8
      %s166 = scalar_lea.vmem %s0, %s165
      %s167 = smul.u32 16, %s14
      %s168 = smul.u32 16, %s14
      %p169 = scmp.lt.s32.totalorder %s168, 31
      %s170 = scalar_select %p169, %s168, 31
      %s171 = smul.addr %s170, 8
      %s172 = scalar_lea.vmem %s3, %s171
      %s173 = smul.u32 16, %s14
      %v174 = vld [vmem:[%s166] sm:$0xff]
      %v175 = vld [vmem:[%s166 + $0x8] sm:$0xff]
      %v176 = vld [vmem:[%s166 + $0x10] sm:$0xff]
      %v177 = vld [vmem:[%s166 + $0x18] sm:$0xff]
      %v178 = vld [vmem:[%s166 + $0x20] sm:$0xff]
      %v179 = vld [vmem:[%s166 + $0x28] sm:$0xff]
      %v180 = vld [vmem:[%s166 + $0x30] sm:$0xff]
      %v181 = vld [vmem:[%s166 + $0x38] sm:$0xff]
      %v182 = vld [vmem:[%s166 + $0x40] sm:$0xff]
      %v183 = vld [vmem:[%s166 + $0x48] sm:$0xff]
      %v184 = vld [vmem:[%s166 + $0x50] sm:$0xff]
      %v185 = vld [vmem:[%s166 + $0x58] sm:$0xff]
      %v186 = vld [vmem:[%s166 + $0x60] sm:$0xff]
      %v187 = vld [vmem:[%s166 + $0x68] sm:$0xff]
      %v188 = vld [vmem:[%s166 + $0x70] sm:$0xff]
      %v189 = vld [vmem:[%s166 + $0x78] sm:$0xff]
      %v190 = vld [vmem:[%s1] sm:$0x1f]
      %vm191 = vcmask 39936
      %v193 = vsel %vm191, %v174, 0
      %v196 = vsel %vm191, %v175, 0
      %v199 = vsel %vm191, %v176, 0
      %v202 = vsel %vm191, %v177, 0
      %v205 = vsel %vm191, %v178, 0
      %v208 = vsel %vm191, %v179, 0
      %v211 = vsel %vm191, %v180, 0
      %v214 = vsel %vm191, %v181, 0
      %v217 = vsel %vm191, %v182, 0
      %v220 = vsel %vm191, %v183, 0
      %v223 = vsel %vm191, %v184, 0
      %v226 = vsel %vm191, %v185, 0
      %v229 = vsel %vm191, %v186, 0
      %v232 = vsel %vm191, %v187, 0
      %v235 = vsel %vm191, %v188, 0
      %v238 = vsel %vm191, %v189, 0
      %vm240 = vcmask 1044480
      %v242 = vsel %vm240, %v190, 0
      %244 = vmatprep.subr.mxu0 0.0
      %245 = vmatpush1.msra.mxu0 %v242
      %246 = vmatprep.subr.mxu0 0.0
      %247 = vmatpush1.msra.mxu0 0.0
      %248 = vmatprep.subr.mxu0 0.0
      %249 = vmatpush1.msra.mxu0 0.0
      %250 = vmatprep.subr.mxu0 0.0
      %251 = vmatpush1.msra.mxu0 0.0
      %252 = vmatprep.subr.mxu0 0.0
      %253 = vmatpush1.msra.mxu0 0.0
      %254 = vmatprep.subr.mxu0 0.0
      %255 = vmatpush1.msra.mxu0 0.0
      %256 = vmatprep.subr.mxu0 0.0
      %257 = vmatpush1.msra.mxu0 0.0
      %258 = vmatprep.subr.mxu0 0.0
      %259 = vmatpush1.msra.mxu0 0.0
      %260 = vmatprep.subr.mxu0 0.0
      %261 = vmatpush1.msra.mxu0 0.0
      %262 = vmatprep.subr.mxu0 0.0
      %263 = vmatpush1.msra.mxu0 0.0
      %264 = vmatprep.subr.mxu0 0.0
      %265 = vmatpush1.msra.mxu0 0.0
      %266 = vmatprep.subr.mxu0 0.0
      %267 = vmatpush1.msra.mxu0 0.0
      %268 = vmatprep.subr.mxu0 0.0
      %269 = vmatpush1.msra.mxu0 0.0
      %270 = vmatprep.subr.mxu0 0.0
      %271 = vmatpush1.msra.mxu0 0.0
      %272 = vmatprep.subr.mxu0 0.0
      %273 = vmatpush1.msra.mxu0 0.0
      %274 = vmatprep.subr.mxu0 0.0
      %275 = vmatpush1.msra.mxu0 0.0
      %276 = vmatprep.subr.mxu0 0.0
      %277 = vmatpush1.msra.mxu0 0.0
      %278 = vmatprep.subr.mxu0 0.0
      %279 = vmatpush1.msra.mxu0 0.0
      %280 = vmatprep.subr.mxu0 0.0
      %281 = vmatpush1.msra.mxu0 0.0
      %282 = vmatprep.subr.mxu0 0.0
      %283 = vmatpush1.msra.mxu0 0.0
      %284 = vmatprep.subr.mxu0 0.0
      %285 = vmatpush1.msra.mxu0 0.0
      %286 = vmatprep.subr.mxu0 0.0
      %287 = vmatpush1.msra.mxu0 0.0
      %288 = vmatprep.subr.mxu0 0.0
      %289 = vmatpush1.msra.mxu0 0.0
      %290 = vmatprep.subr.mxu0 0.0
      %291 = vmatpush1.msra.mxu0 0.0
      %292 = vmatprep.subr.mxu0 0.0
      %293 = vmatpush1.msra.mxu0 0.0
      %294 = vmatprep.subr.mxu0 0.0
      %295 = vmatpush1.msra.mxu0 0.0
      %296 = vmatprep.subr.mxu0 0.0
      %297 = vmatpush1.msra.mxu0 0.0
      %298 = vmatprep.subr.mxu0 0.0
      %299 = vmatpush1.msra.mxu0 0.0
      %300 = vmatprep.subr.mxu0 0.0
      %301 = vmatpush1.msra.mxu0 0.0
      %302 = vmatprep.subr.mxu0 0.0
      %303 = vmatpush1.msra.mxu0 0.0
      %304 = vmatprep.subr.mxu0 0.0
      %305 = vmatpush1.msra.mxu0 0.0
      %306 = vmatprep.subr.mxu0 0.0
      %307 = vmatpush1.msra.mxu0 0.0
      %308 = vmatprep.mubr.f32.mxu0 0.0
      %309 = vmatmul.mubr.f32.gmra.mrb[0].mxu0 %v193
      %v310 = vpop.f32.mrb[0].mxu0
      %v311 = vadd.f32 0.0, %v310
      %v312 = vpop.f32.mrb[0].mxu0
      %313 = vmatprep.mubr.f32.mxu0 0.0
      %314 = vmatmul.mubr.f32.gmra.mrb[0].mxu0 %v196
      %v315 = vpop.f32.mrb[0].mxu0
      %v316 = vadd.f32 0.0, %v315
      %v317 = vpop.f32.mrb[0].mxu0
      %318 = vmatprep.mubr.f32.mxu0 0.0
      %319 = vmatmul.mubr.f32.gmra.mrb[0].mxu0 %v199
      %v320 = vpop.f32.mrb[0].mxu0
      %v321 = vadd.f32 0.0, %v320
      %v322 = vpop.f32.mrb[0].mxu0
      %323 = vmatprep.mubr.f32.mxu0 0.0
      %324 = vmatmul.mubr.f32.gmra.mrb[0].mxu0 %v202
      %v325 = vpop.f32.mrb[0].mxu0
      %v326 = vadd.f32 0.0, %v325
      %v327 = vpop.f32.mrb[0].mxu0
      %328 = vmatprep.mubr.f32.mxu0 0.0
      %329 = vmatmul.mubr.f32.gmra.mrb[0].mxu0 %v205
      %v330 = vpop.f32.mrb[0].mxu0
      %v331 = vadd.f32 0.0, %v330
      %v332 = vpop.f32.mrb[0].mxu0
      %333 = vmatprep.mubr.f32.mxu0 0.0
      %334 = vmatmul.mubr.f32.gmra.mrb[0].mxu0 %v208
      %v335 = vpop.f32.mrb[0].mxu0
      %v336 = vadd.f32 0.0, %v335
      %v337 = vpop.f32.mrb[0].mxu0
      %338 = vmatprep.mubr.f32.mxu0 0.0
      %339 = vmatmul.mubr.f32.gmra.mrb[0].mxu0 %v211
      %v340 = vpop.f32.mrb[0].mxu0
      %v341 = vadd.f32 0.0, %v340
      %v342 = vpop.f32.mrb[0].mxu0
      %343 = vmatprep.mubr.f32.mxu0 0.0
      %344 = vmatmul.mubr.f32.gmra.mrb[0].mxu0 %v214
      %v345 = vpop.f32.mrb[0].mxu0
      %v346 = vadd.f32 0.0, %v345
      %v347 = vpop.f32.mrb[0].mxu0
      %348 = vmatprep.mubr.f32.mxu0 0.0
      %349 = vmatmul.mubr.f32.gmra.mrb[0].mxu0 %v217
      %v350 = vpop.f32.mrb[0].mxu0
      %v351 = vadd.f32 0.0, %v350
      %v352 = vpop.f32.mrb[0].mxu0
      %353 = vmatprep.mubr.f32.mxu0 0.0
      %354 = vmatmul.mubr.f32.gmra.mrb[0].mxu0 %v220
      %v355 = vpop.f32.mrb[0].mxu0
      %v356 = vadd.f32 0.0, %v355
      %v357 = vpop.f32.mrb[0].mxu0
      %358 = vmatprep.mubr.f32.mxu0 0.0
      %359 = vmatmul.mubr.f32.gmra.mrb[0].mxu0 %v223
      %v360 = vpop.f32.mrb[0].mxu0
      %v361 = vadd.f32 0.0, %v360
      %v362 = vpop.f32.mrb[0].mxu0
      %363 = vmatprep.mubr.f32.mxu0 0.0
      %364 = vmatmul.mubr.f32.gmra.mrb[0].mxu0 %v226
      %v365 = vpop.f32.mrb[0].mxu0
      %v366 = vadd.f32 0.0, %v365
      %v367 = vpop.f32.mrb[0].mxu0
      %368 = vmatprep.mubr.f32.mxu0 0.0
      %369 = vmatmul.mubr.f32.gmra.mrb[0].mxu0 %v229
      %v370 = vpop.f32.mrb[0].mxu0
      %v371 = vadd.f32 0.0, %v370
      %v372 = vpop.f32.mrb[0].mxu0
      %373 = vmatprep.mubr.f32.mxu0 0.0
      %374 = vmatmul.mubr.f32.gmra.mrb[0].mxu0 %v232
      %v375 = vpop.f32.mrb[0].mxu0
      %v376 = vadd.f32 0.0, %v375
      %v377 = vpop.f32.mrb[0].mxu0
      %378 = vmatprep.mubr.f32.mxu0 0.0
      %379 = vmatmul.mubr.f32.gmra.mrb[0].mxu0 %v235
      %v380 = vpop.f32.mrb[0].mxu0
      %v381 = vadd.f32 0.0, %v380
      %v382 = vpop.f32.mrb[0].mxu0
      %383 = vmatprep.mubr.f32.mxu0 0.0
      %384 = vmatmul.mubr.f32.gmra.mrb[0].mxu0 %v238
      %v385 = vpop.f32.mrb[0].mxu0
      %v386 = vadd.f32 0.0, %v385
      %v387 = vpop.f32.mrb[0].mxu0
      %388 = vdwg.mxu0
      %v389 = vmax.f32 %v311, 0.0
      %v390 = vmax.f32 %v316, 0.0
      %v391 = vmax.f32 %v321, 0.0
      %v392 = vmax.f32 %v326, 0.0
      %v393 = vmax.f32 %v331, 0.0
      %v394 = vmax.f32 %v336, 0.0
      %v395 = vmax.f32 %v341, 0.0
      %v396 = vmax.f32 %v346, 0.0
      %v397 = vmax.f32 %v351, 0.0
      %v398 = vmax.f32 %v356, 0.0
      %v399 = vmax.f32 %v361, 0.0
      %v400 = vmax.f32 %v366, 0.0
      %v401 = vmax.f32 %v371, 0.0
      %v402 = vmax.f32 %v376, 0.0
      %v403 = vmax.f32 %v381, 0.0
      %v404 = vmax.f32 %v386, 0.0
      %v405 = vld [vmem:[%s2] sm:$0xff]
      %v406 = vld [vmem:[%s2 + $0x8] sm:$0xff]
      %v407 = vld [vmem:[%s2 + $0x10] sm:$0xff]
      %v408 = vld [vmem:[%s2 + $0x18] sm:$0xff]
      %v409 = vld [vmem:[%s2 + $0x20] sm:$0xff]
      %v410 = vld [vmem:[%s2 + $0x28] sm:$0xff]
      %v411 = vld [vmem:[%s2 + $0x30] sm:$0xff]
      %v412 = vld [vmem:[%s2 + $0x38] sm:$0xff]
      %v413 = vld [vmem:[%s2 + $0x40] sm:$0xff]
      %v414 = vld [vmem:[%s2 + $0x48] sm:$0xff]
      %v415 = vld [vmem:[%s2 + $0x50] sm:$0xff]
      %v416 = vld [vmem:[%s2 + $0x58] sm:$0xff]
      %v417 = vld [vmem:[%s2 + $0x60] sm:$0xff]
      %v418 = vld [vmem:[%s2 + $0x68] sm:$0xff]
      %v419 = vld [vmem:[%s2 + $0x70] sm:$0xff]
      %v420 = vld [vmem:[%s2 + $0x78] sm:$0xff]
      %421 = vmatprep.subr.mxu0 0.0
      %422 = vmatpush1.msra.mxu0 %v405
      %423 = vmatprep.subr.mxu0 0.0
      %424 = vmatpush1.msra.mxu0 %v406
      %425 = vmatprep.subr.mxu0 0.0
      %426 = vmatpush1.msra.mxu0 %v407
      %427 = vmatprep.subr.mxu0 0.0
      %428 = vmatpush1.msra.mxu0 %v408
      %429 = vmatprep.subr.mxu0 0.0
      %430 = vmatpush1.msra.mxu0 %v409
      %431 = vmatprep.subr.mxu0 0.0
      %432 = vmatpush1.msra.mxu0 %v410
      %433 = vmatprep.subr.mxu0 0.0
      %434 = vmatpush1.msra.mxu0 %v411
      %435 = vmatprep.subr.mxu0 0.0
      %436 = vmatpush1.msra.mxu0 %v412
      %437 = vmatprep.subr.mxu0 0.0
      %438 = vmatpush1.msra.mxu0 %v413
      %439 = vmatprep.subr.mxu0 0.0
      %440 = vmatpush1.msra.mxu0 %v414
      %441 = vmatprep.subr.mxu0 0.0
      %442 = vmatpush1.msra.mxu0 %v415
      %443 = vmatprep.subr.mxu0 0.0
      %444 = vmatpush1.msra.mxu0 %v416
      %445 = vmatprep.subr.mxu0 0.0
      %446 = vmatpush1.msra.mxu0 %v417
      %447 = vmatprep.subr.mxu0 0.0
      %448 = vmatpush1.msra.mxu0 %v418
      %449 = vmatprep.subr.mxu0 0.0
      %450 = vmatpush1.msra.mxu0 %v419
      %451 = vmatprep.subr.mxu0 0.0
      %452 = vmatpush1.msra.mxu0 %v420
      %453 = vmatprep.subr.mxu0 0.0
      %454 = vmatpush1.msra.mxu0 0.0
      %455 = vmatprep.subr.mxu0 0.0
      %456 = vmatpush1.msra.mxu0 0.0
      %457 = vmatprep.subr.mxu0 0.0
      %458 = vmatpush1.msra.mxu0 0.0
      %459 = vmatprep.subr.mxu0 0.0
      %460 = vmatpush1.msra.mxu0 0.0
      %461 = vmatprep.subr.mxu0 0.0
      %462 = vmatpush1.msra.mxu0 0.0
      %463 = vmatprep.subr.mxu0 0.0
      %464 = vmatpush1.msra.mxu0 0.0
      %465 = vmatprep.subr.mxu0 0.0
      %466 = vmatpush1.msra.mxu0 0.0
      %467 = vmatprep.subr.mxu0 0.0
      %468 = vmatpush1.msra.mxu0 0.0
      %469 = vmatprep.subr.mxu0 0.0
      %470 = vmatpush1.msra.mxu0 0.0
      %471 = vmatprep.subr.mxu0 0.0
      %472 = vmatpush1.msra.mxu0 0.0
      %473 = vmatprep.subr.mxu0 0.0
      %474 = vmatpush1.msra.mxu0 0.0
      %475 = vmatprep.subr.mxu0 0.0
      %476 = vmatpush1.msra.mxu0 0.0
      %477 = vmatprep.subr.mxu0 0.0
      %478 = vmatpush1.msra.mxu0 0.0
      %479 = vmatprep.subr.mxu0 0.0
      %480 = vmatpush1.msra.mxu0 0.0
      %481 = vmatprep.subr.mxu0 0.0
      %482 = vmatpush1.msra.mxu0 0.0
      %483 = vmatprep.subr.mxu0 0.0
      %484 = vmatpush1.msra.mxu0 0.0
      %485 = vmatprep.mubr.f32.mxu0 0.0
      %486 = vmatmul.mubr.f32.gmra.mrb[0].mxu0 %v389
      %v487 = vpop.f32.mrb[0].mxu0
      %v488 = vadd.f32 0.0, %v487
      %v489 = vpop.f32.mrb[0].mxu0
      %490 = vmatprep.mubr.f32.mxu0 0.0
      %491 = vmatmul.mubr.f32.gmra.mrb[0].mxu0 %v390
      %v492 = vpop.f32.mrb[0].mxu0
      %v493 = vadd.f32 0.0, %v492
      %v494 = vpop.f32.mrb[0].mxu0
      %495 = vmatprep.mubr.f32.mxu0 0.0
      %496 = vmatmul.mubr.f32.gmra.mrb[0].mxu0 %v391
      %v497 = vpop.f32.mrb[0].mxu0
      %v498 = vadd.f32 0.0, %v497
      %v499 = vpop.f32.mrb[0].mxu0
      %500 = vmatprep.mubr.f32.mxu0 0.0
      %501 = vmatmul.mubr.f32.gmra.mrb[0].mxu0 %v392
      %v502 = vpop.f32.mrb[0].mxu0
      %v503 = vadd.f32 0.0, %v502
      %v504 = vpop.f32.mrb[0].mxu0
      %505 = vmatprep.mubr.f32.mxu0 0.0
      %506 = vmatmul.mubr.f32.gmra.mrb[0].mxu0 %v393
      %v507 = vpop.f32.mrb[0].mxu0
      %v508 = vadd.f32 0.0, %v507
      %v509 = vpop.f32.mrb[0].mxu0
      %510 = vmatprep.mubr.f32.mxu0 0.0
      %511 = vmatmul.mubr.f32.gmra.mrb[0].mxu0 %v394
      %v512 = vpop.f32.mrb[0].mxu0
      %v513 = vadd.f32 0.0, %v512
      %v514 = vpop.f32.mrb[0].mxu0
      %515 = vmatprep.mubr.f32.mxu0 0.0
      %516 = vmatmul.mubr.f32.gmra.mrb[0].mxu0 %v395
      %v517 = vpop.f32.mrb[0].mxu0
      %v518 = vadd.f32 0.0, %v517
      %v519 = vpop.f32.mrb[0].mxu0
      %520 = vmatprep.mubr.f32.mxu0 0.0
      %521 = vmatmul.mubr.f32.gmra.mrb[0].mxu0 %v396
      %v522 = vpop.f32.mrb[0].mxu0
      %v523 = vadd.f32 0.0, %v522
      %v524 = vpop.f32.mrb[0].mxu0
      %525 = vmatprep.mubr.f32.mxu0 0.0
      %526 = vmatmul.mubr.f32.gmra.mrb[0].mxu0 %v397
      %v527 = vpop.f32.mrb[0].mxu0
      %v528 = vadd.f32 0.0, %v527
      %v529 = vpop.f32.mrb[0].mxu0
      %530 = vmatprep.mubr.f32.mxu0 0.0
      %531 = vmatmul.mubr.f32.gmra.mrb[0].mxu0 %v398
      %v532 = vpop.f32.mrb[0].mxu0
      %v533 = vadd.f32 0.0, %v532
      %v534 = vpop.f32.mrb[0].mxu0
      %535 = vmatprep.mubr.f32.mxu0 0.0
      %536 = vmatmul.mubr.f32.gmra.mrb[0].mxu0 %v399
      %v537 = vpop.f32.mrb[0].mxu0
      %v538 = vadd.f32 0.0, %v537
      %v539 = vpop.f32.mrb[0].mxu0
      %540 = vmatprep.mubr.f32.mxu0 0.0
      %541 = vmatmul.mubr.f32.gmra.mrb[0].mxu0 %v400
      %v542 = vpop.f32.mrb[0].mxu0
      %v543 = vadd.f32 0.0, %v542
      %v544 = vpop.f32.mrb[0].mxu0
      %545 = vmatprep.mubr.f32.mxu0 0.0
      %546 = vmatmul.mubr.f32.gmra.mrb[0].mxu0 %v401
      %v547 = vpop.f32.mrb[0].mxu0
      %v548 = vadd.f32 0.0, %v547
      %v549 = vpop.f32.mrb[0].mxu0
      %550 = vmatprep.mubr.f32.mxu0 0.0
      %551 = vmatmul.mubr.f32.gmra.mrb[0].mxu0 %v402
      %v552 = vpop.f32.mrb[0].mxu0
      %v553 = vadd.f32 0.0, %v552
      %v554 = vpop.f32.mrb[0].mxu0
      %555 = vmatprep.mubr.f32.mxu0 0.0
      %556 = vmatmul.mubr.f32.gmra.mrb[0].mxu0 %v403
      %v557 = vpop.f32.mrb[0].mxu0
      %v558 = vadd.f32 0.0, %v557
      %v559 = vpop.f32.mrb[0].mxu0
      %560 = vmatprep.mubr.f32.mxu0 0.0
      %561 = vmatmul.mubr.f32.gmra.mrb[0].mxu0 %v404
      %v562 = vpop.f32.mrb[0].mxu0
      %v563 = vadd.f32 0.0, %v562
      %v564 = vpop.f32.mrb[0].mxu0
      %565 = vdwg.mxu0
      %566 = vst [vmem:[%s172] sm:$0xff] %v488
      %567 = vst [vmem:[%s172 + $0x8] sm:$0xff] %v493
      %568 = vst [vmem:[%s172 + $0x10] sm:$0xff] %v498
      %569 = vst [vmem:[%s172 + $0x18] sm:$0xff] %v503
      %570 = vst [vmem:[%s172 + $0x20] sm:$0xff] %v508
      %571 = vst [vmem:[%s172 + $0x28] sm:$0xff] %v513
      %572 = vst [vmem:[%s172 + $0x30] sm:$0xff] %v518
      %573 = vst [vmem:[%s172 + $0x38] sm:$0xff] %v523
      %574 = vst [vmem:[%s172 + $0x40] sm:$0xff] %v528
      %575 = vst [vmem:[%s172 + $0x48] sm:$0xff] %v533
      %576 = vst [vmem:[%s172 + $0x50] sm:$0xff] %v538
      %577 = vst [vmem:[%s172 + $0x58] sm:$0xff] %v543
      %578 = vst [vmem:[%s172 + $0x60] sm:$0xff] %v548
      %579 = vst [vmem:[%s172 + $0x68] sm:$0xff] %v553
      %580 = vst [vmem:[%s172 + $0x70] sm:$0xff] %v558
      %581 = vst [vmem:[%s172 + $0x78] sm:$0xff] %v563
      %s582 = smul.u32 16, %s14
      %p583 = scmp.lt.s32.totalorder %s582, 31
      %s584 = scalar_select %p583, %s582, 31
      %s585 = smul.addr %s584, 8
      %s586 = scalar_lea.vmem %s3, %s585
      // Predicated region
      $region33: #{dqn_forward.1} parent=31 // pred_check
        %p587 = pneg %p100
      $region34: #{dqn_forward.1} parent=31 // pred_check_branch
        %589 = sbr.rel (%p587) target = $region36
      $region35: #{dqn_forward.1} parent=31 // pred_region
        %s590 = smul.u32 16, %s14
      $region36: #{dqn_forward.1} parent=31 // pred_fallthru
        _
    $region32: #{dqn_forward.1} parent=5 // pred_fallthru
      _
    %p591 = scmp.le.s32.totalorder 2, %s9
    // Predicated region
    $region37: #{dqn_forward.1} parent=5 // pred_check
      %p592 = pneg %p591
    $region38: #{dqn_forward.1} parent=5 // pred_check_branch
      %594 = sbr.rel (%p592) target = $region40
    $region39: #{dqn_forward.1} parent=5 // pred_region
      %s595 = ssub.s32 %s9, 2
      // Predicated region
      $region41: #{dqn_forward.1} parent=39 // pred_check
        %p596 = pneg %p106
      $region42: #{dqn_forward.1} parent=39 // pred_check_branch
        %598 = sbr.rel (%p596) target = $region44
      $region43: #{dqn_forward.1} parent=39 // pred_region
        %s599 = smul.u32 16, %s15
        %p600 = scmp.lt.s32.totalorder %s599, 31
        %s601 = scalar_select %p600, %s599, 31
        %s602 = smul.addr %s601, 8
        %s603 = scalar_lea.vmem %s3, %s602
      $region44: #{dqn_forward.1} parent=39 // pred_fallthru
        _
    $region40: #{dqn_forward.1} parent=5 // pred_fallthru
      _
  $region6: #{dqn_forward.1} parent=0 // loop_footer
    %s13 = sadd.s32 1, %s9
  $region7: #{dqn_forward.1} parent=0 // loop_footer_branch
    %8 = sbr.rel target = $region3
  $region8: #{dqn_forward.1} parent=0 // loop_exit
    _

</llo_original>
